<compile_context>
chip_gen: v6e
topology: v6e:2x2x1
jax: 0.10.0
libtpu: 0.0.40
codegen_flags: <defaults>
</compile_context>

<pallas_src>
import functools

import jax
import jax.numpy as jnp
from jax.experimental import pallas as pl
from jax.experimental.pallas import tpu as pltpu

D = 128  # lane width used for all padded feature dims


def _round_up(x, m):
    return ((x + m - 1) // m) * m


def dqn_kernel(x_ref, w_ref, b_ref, out_ref):
    # x_ref:   [TB, 128]      activation tile (zero-padded lanes)
    # w_ref:   [3, 128, 128]  packed effective weights (layer i at slot i)
    # b_ref:   [8, 128]       packed effective biases (rows 0..2)
    # out_ref: [TB, 128]      lane-dense output slab
    x = x_ref[...]

    h = jnp.dot(x, w_ref[0], preferred_element_type=jnp.float32) + b_ref[0:1, :]
    h = jnp.maximum(h, 0.0)

    h = jnp.dot(h, w_ref[1], preferred_element_type=jnp.float32) + b_ref[1:2, :]
    h = jnp.maximum(h, 0.0)

    out = jnp.dot(h, w_ref[2], preferred_element_type=jnp.float32) + b_ref[2:3, :]
    out_ref[...] = out.astype(out_ref.dtype)


def compose_noisy_params(params, state_size, hidden, action_size):
    """Fold NoisyLinear noise into effective weights/biases (once per noise
    sample, outside the per-forward hot path) and pack into 2 arrays."""
    w1 = params["w1"] + params["sw1"] * params["ew1"]   # [state_size, hidden]
    w2 = params["w2"] + params["sw2"] * params["ew2"]   # [hidden, hidden]
    w3 = params["w3"] + params["sw3"] * params["ew3"]   # [hidden, action_size]
    b1 = (params["b1"] + params["sb1"] * params["eb1"]).reshape(-1)
    b2 = (params["b2"] + params["sb2"] * params["eb2"]).reshape(-1)
    b3 = (params["b3"] + params["sb3"] * params["eb3"]).reshape(-1)

    w_packed = jnp.zeros((3, D, D), jnp.float32)
    w_packed = w_packed.at[0, :state_size, :hidden].set(w1)
    w_packed = w_packed.at[1, :hidden, :hidden].set(w2)
    w_packed = w_packed.at[2, :hidden, :action_size].set(w3)

    b_packed = jnp.zeros((8, D), jnp.float32)
    b_packed = b_packed.at[0, :hidden].set(b1)
    b_packed = b_packed.at[1, :hidden].set(b2)
    b_packed = b_packed.at[2, :action_size].set(b3)
    return w_packed, b_packed


@functools.partial(jax.jit, static_argnames=("action_size", "tb"))
def dqn_forward(x, w_packed, b_packed, action_size, tb=None):
    """x: [B, state_size] f32. w_packed: [3,128,128]. b_packed: [8,128]."""
    B, S = x.shape
    if tb is None:
        # Batch tile: multiple of 8; cap well under v7x's 64 MiB VMEM budget
        # (x + out double-buffered at 128 lanes * 4 B).
        tb = 512 if B >= 512 else _round_up(max(B, 1), 8)
    B_pad = _round_up(max(B, 1), tb)

    # Lane-dense, sublane-aligned activation slab.
    x_pad = jnp.zeros((B_pad, D), jnp.float32).at[:B, :S].set(x)

    out = pl.pallas_call(
        dqn_kernel,
        out_shape=jax.ShapeDtypeStruct((B_pad, D), jnp.float32),
        grid=(B_pad // tb,),
        in_specs=[
            pl.BlockSpec((tb, D), lambda i: (i, 0)),        # x: streams per tile
            pl.BlockSpec((3, D, D), lambda i: (0, 0, 0)),   # weights: VMEM-resident
            pl.BlockSpec((8, D), lambda i: (0, 0)),         # biases:  VMEM-resident
        ],
        out_specs=pl.BlockSpec((tb, D), lambda i: (i, 0)),
        compiler_params=pltpu.CompilerParams(
            dimension_semantics=("parallel",)),             # 2-TC sharding on v7x
    )(x_pad, w_packed, b_packed)

    return out[:B, :action_size]


def init_params(key, state_size, hidden, action_size, sigma_init=0.017):
    """Synthetic init matching NoisyLinear parameter shapes.
    Weights are stored [in, out] (transposed vs PyTorch's [out, in])."""
    def layer(key, fan_in, fan_out):
        k_w, k_b, k_sw, k_sb = jax.random.split(key, 4)
        bound = 1.0 / jnp.sqrt(fan_in)
        w = jax.random.uniform(k_w, (fan_in, fan_out), jnp.float32, -bound, bound)
        b = jax.random.uniform(k_b, (1, fan_out), jnp.float32, -bound, bound)
        sw = jnp.full((fan_in, fan_out), sigma_init, jnp.float32) \
            * jax.random.uniform(k_sw, (fan_in, fan_out), jnp.float32, 0.5, 1.5)
        sb = jnp.full((1, fan_out), sigma_init, jnp.float32) \
            * jax.random.uniform(k_sb, (1, fan_out), jnp.float32, 0.5, 1.5)
        ew = jnp.zeros((fan_in, fan_out), jnp.float32)
        eb = jnp.zeros((1, fan_out), jnp.float32)
        return w, b, sw, sb, ew, eb

    k1, k2, k3 = jax.random.split(key, 3)
    w1, b1, sw1, sb1, ew1, eb1 = layer(k1, state_size, hidden)
    w2, b2, sw2, sb2, ew2, eb2 = layer(k2, hidden, hidden)
    w3, b3, sw3, sb3, ew3, eb3 = layer(k3, hidden, action_size)
    return dict(
        w1=w1, b1=b1, sw1=sw1, sb1=sb1, ew1=ew1, eb1=eb1,
        w2=w2, b2=b2, sw2=sw2, sb2=sb2, ew2=ew2, eb2=eb2,
        w3=w3, b3=b3, sw3=sw3, sb3=sb3, ew3=ew3, eb3=eb3,
    )


def dqn_reference(x, p):
    """Pure-JAX reference (same math as the PyTorch forward)."""
    h = x @ (p["w1"] + p["sw1"] * p["ew1"]) + (p["b1"] + p["sb1"] * p["eb1"])
    h = jnp.maximum(h, 0.0)
    h = h @ (p["w2"] + p["sw2"] * p["ew2"]) + (p["b2"] + p["sb2"] * p["eb2"])
    h = jnp.maximum(h, 0.0)
    return h @ (p["w3"] + p["sw3"] * p["ew3"]) + (p["b3"] + p["sb3"] * p["eb3"])


if __name__ == "__main__":
    state_size, hidden, action_size, batch = 16, 24, 4, 2

    key = jax.random.PRNGKey(0)
    k_params, k_x, k_noise = jax.random.split(key, 3)
    params = init_params(k_params, state_size, hidden, action_size)

    # Give epsilon buffers nonzero values (mimics sample_noise) so the noisy
    # parameter path is actually exercised.
    kws = jax.random.split(k_noise, 6)
    params["ew1"] = jax.random.normal(kws[0], params["ew1"].shape, jnp.float32)
    params["eb1"] = jax.random.normal(kws[1], params["eb1"].shape, jnp.float32)
    params["ew2"] = jax.random.normal(kws[2], params["ew2"].shape, jnp.float32)
    params["eb2"] = jax.random.normal(kws[3], params["eb2"].shape, jnp.float32)
    params["ew3"] = jax.random.normal(kws[4], params["ew3"].shape, jnp.float32)
    params["eb3"] = jax.random.normal(kws[5], params["eb3"].shape, jnp.float32)

    x = jax.random.normal(k_x, (batch, state_size), jnp.float32)

    # Noise composition happens once per noise sample, outside the hot path.
    w_packed, b_packed = compose_noisy_params(params, state_size, hidden, action_size)

    out = dqn_forward(x, w_packed, b_packed, action_size)
    out = jax.block_until_ready(out)

    ref = dqn_reference(x, params)
    assert out.shape == (batch, action_size)
    assert jnp.allclose(out, ref, atol=1e-4, rtol=1e-4), "mismatch vs reference"

    print("KERNEL_OK")
</pallas_src>

<mosaic_0001>
module attributes {stable_mosaic.version = 11 : i64} {
  func.func @dqn_kernel(%arg0: i32, %arg1: memref<8x128xf32, #tpu.memory_space<vmem>>, %arg2: memref<3x128x128xf32, #tpu.memory_space<vmem>>, %arg3: memref<8x128xf32, #tpu.memory_space<vmem>>, %arg4: memref<8x128xf32, #tpu.memory_space<vmem>>) attributes {dimension_semantics = [#tpu.dimension_semantics<parallel>], iteration_bounds = array<i64: 1>, scalar_prefetch = 0 : i64, scratch_operands = 0 : i64, tpu.core_type = #tpu.core_type<tc>, window_params = [{transform_indices = @transform_0, window_bounds = array<i64: 8, 128>}, {pipeline_mode = #tpu.pipeline_mode<synchronous>, transform_indices = @transform_1, window_bounds = array<i64: 3, 128, 128>}, {pipeline_mode = #tpu.pipeline_mode<synchronous>, transform_indices = @transform_2, window_bounds = array<i64: 8, 128>}, {transform_indices = @transform_3, window_bounds = array<i64: 8, 128>}]} {
    %c0 = arith.constant 0 : index
    %c0_0 = arith.constant 0 : index
    %0 = vector.load %arg1[%c0, %c0_0] : memref<8x128xf32, #tpu.memory_space<vmem>>, vector<8x128xf32>
    %c0_1 = arith.constant 0 : index
    %c0_2 = arith.constant 0 : index
    %c0_3 = arith.constant 0 : index
    %1 = vector.load %arg2[%c0_1, %c0_2, %c0_3] : memref<3x128x128xf32, #tpu.memory_space<vmem>>, vector<1x128x128xf32>
    %2 = vector.shape_cast %1 : vector<1x128x128xf32> to vector<128x128xf32>
    %cst = arith.constant dense<0.000000e+00> : vector<8x128xf32>
    %3 = tpu.matmul %0, %2, %cst {dimension_numbers = #tpu.dot_dimension_numbers<[1], [0], [0], [1], [0, 0, 1, 1], [], []>} : vector<8x128xf32>, vector<128x128xf32>, vector<8x128xf32> -> vector<8x128xf32>
    %c0_4 = arith.constant 0 : index
    %c0_5 = arith.constant 0 : index
    %4 = vector.load %arg3[%c0_4, %c0_5] : memref<8x128xf32, #tpu.memory_space<vmem>>, vector<1x128xf32>
    %5 = vector.broadcast %4 : vector<1x128xf32> to vector<8x128xf32>
    %6 = arith.addf %3, %5 : vector<8x128xf32>
    %cst_6 = arith.constant 0.000000e+00 : f32
    %7 = vector.broadcast %cst_6 : f32 to vector<8x128xf32>
    %8 = arith.maximumf %6, %7 : vector<8x128xf32>
    %c1 = arith.constant 1 : index
    %c0_7 = arith.constant 0 : index
    %c0_8 = arith.constant 0 : index
    %9 = vector.load %arg2[%c1, %c0_7, %c0_8] : memref<3x128x128xf32, #tpu.memory_space<vmem>>, vector<1x128x128xf32>
    %10 = vector.shape_cast %9 : vector<1x128x128xf32> to vector<128x128xf32>
    %cst_9 = arith.constant dense<0.000000e+00> : vector<8x128xf32>
    %11 = tpu.matmul %8, %10, %cst_9 {dimension_numbers = #tpu.dot_dimension_numbers<[1], [0], [0], [1], [0, 0, 1, 1], [], []>} : vector<8x128xf32>, vector<128x128xf32>, vector<8x128xf32> -> vector<8x128xf32>
    %c1_10 = arith.constant 1 : index
    %c0_11 = arith.constant 0 : index
    %12 = vector.load %arg3[%c1_10, %c0_11] : memref<8x128xf32, #tpu.memory_space<vmem>>, vector<1x128xf32>
    %13 = vector.broadcast %12 : vector<1x128xf32> to vector<8x128xf32>
    %14 = arith.addf %11, %13 : vector<8x128xf32>
    %cst_12 = arith.constant 0.000000e+00 : f32
    %15 = vector.broadcast %cst_12 : f32 to vector<8x128xf32>
    %16 = arith.maximumf %14, %15 : vector<8x128xf32>
    %c2 = arith.constant 2 : index
    %c0_13 = arith.constant 0 : index
    %c0_14 = arith.constant 0 : index
    %17 = vector.load %arg2[%c2, %c0_13, %c0_14] : memref<3x128x128xf32, #tpu.memory_space<vmem>>, vector<1x128x128xf32>
    %18 = vector.shape_cast %17 : vector<1x128x128xf32> to vector<128x128xf32>
    %cst_15 = arith.constant dense<0.000000e+00> : vector<8x128xf32>
    %19 = tpu.matmul %16, %18, %cst_15 {dimension_numbers = #tpu.dot_dimension_numbers<[1], [0], [0], [1], [0, 0, 1, 1], [], []>} : vector<8x128xf32>, vector<128x128xf32>, vector<8x128xf32> -> vector<8x128xf32>
    %c2_16 = arith.constant 2 : index
    %c0_17 = arith.constant 0 : index
    %20 = vector.load %arg3[%c2_16, %c0_17] : memref<8x128xf32, #tpu.memory_space<vmem>>, vector<1x128xf32>
    %21 = vector.broadcast %20 : vector<1x128xf32> to vector<8x128xf32>
    %22 = arith.addf %19, %21 : vector<8x128xf32>
    %c0_18 = arith.constant 0 : index
    %c0_19 = arith.constant 0 : index
    %23 = vector.load %arg4[%c0_18, %c0_19] : memref<8x128xf32, #tpu.memory_space<vmem>>, vector<8x128xf32>
    tpu.vector_store %arg4[%c0_18, %c0_19], %22 {strides = array<i32>} : memref<8x128xf32, #tpu.memory_space<vmem>>, vector<8x128xf32>,
    return
  }
  func.func @transform_0(%arg0: i32) -> (i32, i32) {
    %c0_i32 = arith.constant 0 : i32
    %c0_i32_0 = arith.constant 0 : i32
    return %arg0, %c0_i32 : i32, i32
  }
  func.func @transform_1(%arg0: i32) -> (i32, i32, i32) {
    %c0_i32 = arith.constant 0 : i32
    %c0_i32_0 = arith.constant 0 : i32
    %c0_i32_1 = arith.constant 0 : i32
    %c0_i32_2 = arith.constant 0 : i32
    return %c0_i32, %c0_i32_0, %c0_i32_1 : i32, i32, i32
  }
  func.func @transform_2(%arg0: i32) -> (i32, i32) {
    %c0_i32 = arith.constant 0 : i32
    %c0_i32_0 = arith.constant 0 : i32
    %c0_i32_1 = arith.constant 0 : i32
    return %c0_i32, %c0_i32_0 : i32, i32
  }
  func.func @transform_3(%arg0: i32) -> (i32, i32) {
    %c0_i32 = arith.constant 0 : i32
    %c0_i32_0 = arith.constant 0 : i32
    return %arg0, %c0_i32 : i32, i32
  }
}

</mosaic_0001>

<llo_original>
// kernel: dqn_forward.1
$region0: #{dqn_forward.1}
  #allocation0 [shape = 'u32[]', space=smem, size = 0x4, offset = 0x4, fixed_abs, tag = 'smem constant byte address 0x4 - core index']
  #allocation1 [shape = 'u32[144,128]{1,0:T(1,128)}', space=vmem, size = 0x12000, scoped, tag = 'internal scratch']
  %s0 = inlined_call_operand.vmem [shape: f32[8,128], index: 0, kind: input, shape index: {}]
  %s1 = inlined_call_operand.hbm [shape: f32[3,128,128], index: 1, kind: input, shape index: {}]
  %s2 = inlined_call_operand.vmem [shape: f32[8,128], index: 2, kind: input, shape index: {}]
  %s3 = inlined_call_operand.vmem [shape: f32[8,128], index: 3, kind: output, shape index: {}]
  %s4 = sld [smem:[#allocation0]]
  $region26: #{dqn_forward.1} parent=0
    _
  %s6 = ssub.s32 1, %s4
  %s7 = scalar_select 0, %s6, %s4
  $region1: #{dqn_forward.1} parent=0
    #allocation2 [shape = 'u8[196608]{0}', space=vmem, size = 0x30000, scoped, tag = 'input window, operand 1, single buffered']
    #allocation3 [shape = 's32[1]{0}', space=sflag, size = 0x4, scoped, tag = 'scoped memory for dqn_forward.1']
    %8 = vsyncpa [#allocation3], 0
    // Predicated region
    $region2: #{dqn_forward.1} parent=1 // pred_check
      _
    $region3: #{dqn_forward.1} parent=1 // pred_check_branch
      %10 = sbr.rel (0) target = $region5
    $region4: #{dqn_forward.1} parent=1 // pred_region
      _
    $region5: #{dqn_forward.1} parent=1 // pred_fallthru
      _
    // Predicated region
    $region6: #{dqn_forward.1} parent=1 // pred_check
      _
    $region7: #{dqn_forward.1} parent=1 // pred_check_branch
      %12 = sbr.rel (0) target = $region9
    $region8: #{dqn_forward.1} parent=1 // pred_region
      %s14 = ssub.s32 6144, 6144
      %15 = vsyncadd [#allocation3], %s14
      %s16 = sshll.u32 [#allocation2], 4
      %s17 = int_to_ptr.vmem [resolvable:$true] %s16
      %22 = dma.hbm_to_vmem [thread:$0]  %s1, 6144, %s17, [#allocation3], 128, 128, 8
    $region9: #{dqn_forward.1} parent=1 // pred_fallthru
      _
    // Predicated region
    $region10: #{dqn_forward.1} parent=1 // pred_check
      _
    $region11: #{dqn_forward.1} parent=1 // pred_check_branch
      %24 = sbr.rel (0) target = $region13
    $region12: #{dqn_forward.1} parent=1 // pred_region
      _
    $region13: #{dqn_forward.1} parent=1 // pred_fallthru
      _
    // Predicated region
    $region14: #{dqn_forward.1} parent=1 // pred_check
      _
    $region15: #{dqn_forward.1} parent=1 // pred_check_branch
      %26 = sbr.rel (0) target = $region17
    $region16: #{dqn_forward.1} parent=1 // pred_region
      %27 = dma.done [#allocation3], 6144
    $region17: #{dqn_forward.1} parent=1 // pred_fallthru
      _
    %v28 = vld [vmem:[%s0] sm:$0xff]
    %v29 = vld [vmem:[#allocation2] sm:$0xff]
    %v30 = vld [vmem:[#allocation2 + $0x8] sm:$0xff]
    %v31 = vld [vmem:[#allocation2 + $0x10] sm:$0xff]
    %v32 = vld [vmem:[#allocation2 + $0x18] sm:$0xff]
    %v33 = vld [vmem:[#allocation2 + $0x20] sm:$0xff]
    %v34 = vld [vmem:[#allocation2 + $0x28] sm:$0xff]
    %v35 = vld [vmem:[#allocation2 + $0x30] sm:$0xff]
    %v36 = vld [vmem:[#allocation2 + $0x38] sm:$0xff]
    %v37 = vld [vmem:[#allocation2 + $0x40] sm:$0xff]
    %v38 = vld [vmem:[#allocation2 + $0x48] sm:$0xff]
    %v39 = vld [vmem:[#allocation2 + $0x50] sm:$0xff]
    %v40 = vld [vmem:[#allocation2 + $0x58] sm:$0xff]
    %v41 = vld [vmem:[#allocation2 + $0x60] sm:$0xff]
    %v42 = vld [vmem:[#allocation2 + $0x68] sm:$0xff]
    %v43 = vld [vmem:[#allocation2 + $0x70] sm:$0xff]
    %v44 = vld [vmem:[#allocation2 + $0x78] sm:$0xff]
    %v45 = vld [vmem:[%s2] sm:$0x1]
    %v46 = vlaneseq
    %v47 = vshrl.u32 %v46, 7
    %v48 = vsub.s32 0, %v47
    %v49 = vrot.slane %v45, %v48
    %50 = vmatprep.subr.mxu0 0.0
    %51 = vmatpush1.msra.mxu0 %v44
    %52 = vmatprep.subr.mxu0 0.0
    %53 = vmatpush1.msra.mxu0 %v43
    %54 = vmatprep.subr.mxu0 0.0
    %55 = vmatpush1.msra.mxu0 %v42
    %56 = vmatprep.subr.mxu0 0.0
    %57 = vmatpush1.msra.mxu0 %v41
    %58 = vmatprep.subr.mxu0 0.0
    %59 = vmatpush1.msra.mxu0 %v40
    %60 = vmatprep.subr.mxu0 0.0
    %61 = vmatpush1.msra.mxu0 %v39
    %62 = vmatprep.subr.mxu0 0.0
    %63 = vmatpush1.msra.mxu0 %v38
    %64 = vmatprep.subr.mxu0 0.0
    %65 = vmatpush1.msra.mxu0 %v37
    %66 = vmatprep.subr.mxu0 0.0
    %67 = vmatpush1.msra.mxu0 %v36
    %68 = vmatprep.subr.mxu0 0.0
    %69 = vmatpush1.msra.mxu0 %v35
    %70 = vmatprep.subr.mxu0 0.0
    %71 = vmatpush1.msra.mxu0 %v34
    %72 = vmatprep.subr.mxu0 0.0
    %73 = vmatpush1.msra.mxu0 %v33
    %74 = vmatprep.subr.mxu0 0.0
    %75 = vmatpush1.msra.mxu0 %v32
    %76 = vmatprep.subr.mxu0 0.0
    %77 = vmatpush1.msra.mxu0 %v31
    %78 = vmatprep.subr.mxu0 0.0
    %79 = vmatpush1.msra.mxu0 %v30
    %80 = vmatprep.subr.mxu0 0.0
    %81 = vmatpush1.msra.mxu0 %v29
    %82 = vmatprep.subr.mxu0 0.0
    %83 = vmatpush2.msra.mxu0 0.0
    %84 = vmatprep.subr.mxu0 0.0
    %85 = vmatpush2.msra.mxu0 0.0
    %86 = vmatprep.subr.mxu0 0.0
    %87 = vmatpush2.msra.mxu0 0.0
    %88 = vmatprep.subr.mxu0 0.0
    %89 = vmatpush2.msra.mxu0 0.0
    %90 = vmatprep.subr.mxu0 0.0
    %91 = vmatpush2.msra.mxu0 0.0
    %92 = vmatprep.subr.mxu0 0.0
    %93 = vmatpush2.msra.mxu0 0.0
    %94 = vmatprep.subr.mxu0 0.0
    %95 = vmatpush2.msra.mxu0 0.0
    %96 = vmatprep.subr.mxu0 0.0
    %97 = vmatpush2.msra.mxu0 0.0
    %98 = vmatprep.subr.mxu0 0.0
    %99 = vmatpush2.msra.mxu0 0.0
    %100 = vmatprep.subr.mxu0 0.0
    %101 = vmatpush2.msra.mxu0 0.0
    %102 = vmatprep.subr.mxu0 0.0
    %103 = vmatpush2.msra.mxu0 0.0
    %104 = vmatprep.subr.mxu0 0.0
    %105 = vmatpush2.msra.mxu0 0.0
    %106 = vmatprep.subr.mxu0 0.0
    %107 = vmatpush2.msra.mxu0 0.0
    %108 = vmatprep.subr.mxu0 0.0
    %109 = vmatpush2.msra.mxu0 0.0
    %110 = vmatprep.subr.mxu0 0.0
    %111 = vmatpush2.msra.mxu0 0.0
    %112 = vmatprep.subr.mxu0 0.0
    %113 = vmatpush2.msra.mxu0 0.0
    %114 = vmatprep.mubr.f32.mxu0 0.0
    %115 = vmatmul.mubr.f32.gmra.mxu0 %v28
    %v116 = vpop.f32.mrf.mxu0
    %v117 = vadd.f32 %v49, %v116
    %v118 = vpop.f32.mrf.mxu0
    %119 = vdwg.mxu0
    %v120 = vmax.f32 %v117, 0.0
    %s121 = scalar_lea.vmem [#allocation2], 128
    %v122 = vld [vmem:[%s121] sm:$0xff]
    %v123 = vld [vmem:[%s121 + $0x8] sm:$0xff]
    %v124 = vld [vmem:[%s121 + $0x10] sm:$0xff]
    %v125 = vld [vmem:[%s121 + $0x18] sm:$0xff]
    %v126 = vld [vmem:[%s121 + $0x20] sm:$0xff]
    %v127 = vld [vmem:[%s121 + $0x28] sm:$0xff]
    %v128 = vld [vmem:[%s121 + $0x30] sm:$0xff]
    %v129 = vld [vmem:[%s121 + $0x38] sm:$0xff]
    %v130 = vld [vmem:[%s121 + $0x40] sm:$0xff]
    %v131 = vld [vmem:[%s121 + $0x48] sm:$0xff]
    %v132 = vld [vmem:[%s121 + $0x50] sm:$0xff]
    %v133 = vld [vmem:[%s121 + $0x58] sm:$0xff]
    %v134 = vld [vmem:[%s121 + $0x60] sm:$0xff]
    %v135 = vld [vmem:[%s121 + $0x68] sm:$0xff]
    %v136 = vld [vmem:[%s121 + $0x70] sm:$0xff]
    %v137 = vld [vmem:[%s121 + $0x78] sm:$0xff]
    %v138 = vld [vmem:[%s2 + $0x1] sm:$0x1]
    %v139 = vlaneseq
    %v140 = vshrl.u32 %v139, 7
    %v141 = vsub.s32 0, %v140
    %v142 = vrot.slane %v138, %v141
    %143 = vmatprep.subr.mxu0 0.0
    %144 = vmatpush1.msra.mxu0 %v137
    %145 = vmatprep.subr.mxu0 0.0
    %146 = vmatpush1.msra.mxu0 %v136
    %147 = vmatprep.subr.mxu0 0.0
    %148 = vmatpush1.msra.mxu0 %v135
    %149 = vmatprep.subr.mxu0 0.0
    %150 = vmatpush1.msra.mxu0 %v134
    %151 = vmatprep.subr.mxu0 0.0
    %152 = vmatpush1.msra.mxu0 %v133
    %153 = vmatprep.subr.mxu0 0.0
    %154 = vmatpush1.msra.mxu0 %v132
    %155 = vmatprep.subr.mxu0 0.0
    %156 = vmatpush1.msra.mxu0 %v131
    %157 = vmatprep.subr.mxu0 0.0
    %158 = vmatpush1.msra.mxu0 %v130
    %159 = vmatprep.subr.mxu0 0.0
    %160 = vmatpush1.msra.mxu0 %v129
    %161 = vmatprep.subr.mxu0 0.0
    %162 = vmatpush1.msra.mxu0 %v128
    %163 = vmatprep.subr.mxu0 0.0
    %164 = vmatpush1.msra.mxu0 %v127
    %165 = vmatprep.subr.mxu0 0.0
    %166 = vmatpush1.msra.mxu0 %v126
    %167 = vmatprep.subr.mxu0 0.0
    %168 = vmatpush1.msra.mxu0 %v125
    %169 = vmatprep.subr.mxu0 0.0
    %170 = vmatpush1.msra.mxu0 %v124
    %171 = vmatprep.subr.mxu0 0.0
    %172 = vmatpush1.msra.mxu0 %v123
    %173 = vmatprep.subr.mxu0 0.0
    %174 = vmatpush1.msra.mxu0 %v122
    %175 = vmatprep.subr.mxu0 0.0
    %176 = vmatpush2.msra.mxu0 0.0
    %177 = vmatprep.subr.mxu0 0.0
    %178 = vmatpush2.msra.mxu0 0.0
    %179 = vmatprep.subr.mxu0 0.0
    %180 = vmatpush2.msra.mxu0 0.0
    %181 = vmatprep.subr.mxu0 0.0
    %182 = vmatpush2.msra.mxu0 0.0
    %183 = vmatprep.subr.mxu0 0.0
    %184 = vmatpush2.msra.mxu0 0.0
    %185 = vmatprep.subr.mxu0 0.0
    %186 = vmatpush2.msra.mxu0 0.0
    %187 = vmatprep.subr.mxu0 0.0
    %188 = vmatpush2.msra.mxu0 0.0
    %189 = vmatprep.subr.mxu0 0.0
    %190 = vmatpush2.msra.mxu0 0.0
    %191 = vmatprep.subr.mxu0 0.0
    %192 = vmatpush2.msra.mxu0 0.0
    %193 = vmatprep.subr.mxu0 0.0
    %194 = vmatpush2.msra.mxu0 0.0
    %195 = vmatprep.subr.mxu0 0.0
    %196 = vmatpush2.msra.mxu0 0.0
    %197 = vmatprep.subr.mxu0 0.0
    %198 = vmatpush2.msra.mxu0 0.0
    %199 = vmatprep.subr.mxu0 0.0
    %200 = vmatpush2.msra.mxu0 0.0
    %201 = vmatprep.subr.mxu0 0.0
    %202 = vmatpush2.msra.mxu0 0.0
    %203 = vmatprep.subr.mxu0 0.0
    %204 = vmatpush2.msra.mxu0 0.0
    %205 = vmatprep.subr.mxu0 0.0
    %206 = vmatpush2.msra.mxu0 0.0
    %207 = vmatprep.mubr.f32.mxu0 0.0
    %208 = vmatmul.mubr.f32.gmra.mxu0 %v120
    %v209 = vpop.f32.mrf.mxu0
    %v210 = vadd.f32 %v142, %v209
    %v211 = vpop.f32.mrf.mxu0
    %212 = vdwg.mxu0
    %v213 = vmax.f32 %v210, 0.0
    %s214 = scalar_lea.vmem [#allocation2], 256
    %v215 = vld [vmem:[%s214] sm:$0xff]
    %v216 = vld [vmem:[%s214 + $0x8] sm:$0xff]
    %v217 = vld [vmem:[%s214 + $0x10] sm:$0xff]
    %v218 = vld [vmem:[%s214 + $0x18] sm:$0xff]
    %v219 = vld [vmem:[%s214 + $0x20] sm:$0xff]
    %v220 = vld [vmem:[%s214 + $0x28] sm:$0xff]
    %v221 = vld [vmem:[%s214 + $0x30] sm:$0xff]
    %v222 = vld [vmem:[%s214 + $0x38] sm:$0xff]
    %v223 = vld [vmem:[%s214 + $0x40] sm:$0xff]
    %v224 = vld [vmem:[%s214 + $0x48] sm:$0xff]
    %v225 = vld [vmem:[%s214 + $0x50] sm:$0xff]
    %v226 = vld [vmem:[%s214 + $0x58] sm:$0xff]
    %v227 = vld [vmem:[%s214 + $0x60] sm:$0xff]
    %v228 = vld [vmem:[%s214 + $0x68] sm:$0xff]
    %v229 = vld [vmem:[%s214 + $0x70] sm:$0xff]
    %v230 = vld [vmem:[%s214 + $0x78] sm:$0xff]
    %v231 = vld [vmem:[%s2 + $0x2] sm:$0x1]
    %v232 = vlaneseq
    %v233 = vshrl.u32 %v232, 7
    %v234 = vsub.s32 0, %v233
    %v235 = vrot.slane %v231, %v234
    %236 = vmatprep.subr.mxu0 0.0
    %237 = vmatpush1.msra.mxu0 %v230
    %238 = vmatprep.subr.mxu0 0.0
    %239 = vmatpush1.msra.mxu0 %v229
    %240 = vmatprep.subr.mxu0 0.0
    %241 = vmatpush1.msra.mxu0 %v228
    %242 = vmatprep.subr.mxu0 0.0
    %243 = vmatpush1.msra.mxu0 %v227
    %244 = vmatprep.subr.mxu0 0.0
    %245 = vmatpush1.msra.mxu0 %v226
    %246 = vmatprep.subr.mxu0 0.0
    %247 = vmatpush1.msra.mxu0 %v225
    %248 = vmatprep.subr.mxu0 0.0
    %249 = vmatpush1.msra.mxu0 %v224
    %250 = vmatprep.subr.mxu0 0.0
    %251 = vmatpush1.msra.mxu0 %v223
    %252 = vmatprep.subr.mxu0 0.0
    %253 = vmatpush1.msra.mxu0 %v222
    %254 = vmatprep.subr.mxu0 0.0
    %255 = vmatpush1.msra.mxu0 %v221
    %256 = vmatprep.subr.mxu0 0.0
    %257 = vmatpush1.msra.mxu0 %v220
    %258 = vmatprep.subr.mxu0 0.0
    %259 = vmatpush1.msra.mxu0 %v219
    %260 = vmatprep.subr.mxu0 0.0
    %261 = vmatpush1.msra.mxu0 %v218
    %262 = vmatprep.subr.mxu0 0.0
    %263 = vmatpush1.msra.mxu0 %v217
    %264 = vmatprep.subr.mxu0 0.0
    %265 = vmatpush1.msra.mxu0 %v216
    %266 = vmatprep.subr.mxu0 0.0
    %267 = vmatpush1.msra.mxu0 %v215
    %268 = vmatprep.subr.mxu0 0.0
    %269 = vmatpush2.msra.mxu0 0.0
    %270 = vmatprep.subr.mxu0 0.0
    %271 = vmatpush2.msra.mxu0 0.0
    %272 = vmatprep.subr.mxu0 0.0
    %273 = vmatpush2.msra.mxu0 0.0
    %274 = vmatprep.subr.mxu0 0.0
    %275 = vmatpush2.msra.mxu0 0.0
    %276 = vmatprep.subr.mxu0 0.0
    %277 = vmatpush2.msra.mxu0 0.0
    %278 = vmatprep.subr.mxu0 0.0
    %279 = vmatpush2.msra.mxu0 0.0
    %280 = vmatprep.subr.mxu0 0.0
    %281 = vmatpush2.msra.mxu0 0.0
    %282 = vmatprep.subr.mxu0 0.0
    %283 = vmatpush2.msra.mxu0 0.0
    %284 = vmatprep.subr.mxu0 0.0
    %285 = vmatpush2.msra.mxu0 0.0
    %286 = vmatprep.subr.mxu0 0.0
    %287 = vmatpush2.msra.mxu0 0.0
    %288 = vmatprep.subr.mxu0 0.0
    %289 = vmatpush2.msra.mxu0 0.0
    %290 = vmatprep.subr.mxu0 0.0
    %291 = vmatpush2.msra.mxu0 0.0
    %292 = vmatprep.subr.mxu0 0.0
    %293 = vmatpush2.msra.mxu0 0.0
    %294 = vmatprep.subr.mxu0 0.0
    %295 = vmatpush2.msra.mxu0 0.0
    %296 = vmatprep.subr.mxu0 0.0
    %297 = vmatpush2.msra.mxu0 0.0
    %298 = vmatprep.subr.mxu0 0.0
    %299 = vmatpush2.msra.mxu0 0.0
    %300 = vmatprep.mubr.f32.mxu0 0.0
    %301 = vmatmul.mubr.f32.gmra.mxu0 %v213
    %v302 = vpop.f32.mrf.mxu0
    %v303 = vadd.f32 %v235, %v302
    %v304 = vpop.f32.mrf.mxu0
    %305 = vdwg.mxu0
    %306 = vst [vmem:[%s3] sm:$0xff] %v303
    // Predicated region
    $region18: #{dqn_forward.1} parent=1 // pred_check
      _
    $region19: #{dqn_forward.1} parent=1 // pred_check_branch
      %308 = sbr.rel (0) target = $region21
    $region20: #{dqn_forward.1} parent=1 // pred_region
      _
    $region21: #{dqn_forward.1} parent=1 // pred_fallthru
      _
    // Predicated region
    $region22: #{dqn_forward.1} parent=1 // pred_check
      _
    $region23: #{dqn_forward.1} parent=1 // pred_check_branch
      %310 = sbr.rel (0) target = $region25
    $region24: #{dqn_forward.1} parent=1 // pred_region
      _
    $region25: #{dqn_forward.1} parent=1 // pred_fallthru
      _
    %311 = vsyncpa [#allocation3], 1

</llo_original>
